<compile_context>
chip_gen: v5e
topology: v5e:2x2
jax: 0.10.0
libtpu: 0.0.40
codegen_flags: <defaults>
</compile_context>

<pallas_src>
import math

import jax
import jax.numpy as jnp
from jax.experimental import pallas as pl
from jax.experimental.pallas import tpu as pltpu

EPS = 1e-5
INV_SQRT2 = 1.0 / math.sqrt(2.0)

# Row-tile cap (multiple of 8 sublanes). Bounds the x/out tiles and the
# (BR, hidden) f32 GELU intermediate so real token counts don't overflow
# scoped VMEM (64 MiB physical on v7x) while keeping the ~0.35us per-step
# pipeline overhead amortized.
MAX_BLOCK_ROWS = 256


def _round_up(n, m):
    return (n + m - 1) // m * m


# ------------------------------------------------------------------
# Fused FeedForward kernel: operates on a (block_rows, dim) tile.
# ------------------------------------------------------------------
def ff_kernel(x_ref, g_ref, b_ref, w1_ref, b1_ref, w2_ref, b2_ref, o_ref):
    # Upcast activations to f32 in-kernel (VPU cast is ~free; avoids a
    # wrapper-side HBM round trip and halves activation DMA when x is bf16).
    x = x_ref[...].astype(jnp.float32)                         # (BR, D)

    # Single-pass LayerNorm statistics: E[x] and E[x^2] together.
    mu = jnp.mean(x, axis=-1, keepdims=True)
    ex2 = jnp.mean(x * x, axis=-1, keepdims=True)
    var = jnp.maximum(ex2 - mu * mu, 0.0)
    xn = (x - mu) * jax.lax.rsqrt(var + EPS) * g_ref[...] + b_ref[...]

    # Linear 1 on the MXU: bf16 operands (cast after the DMA), f32 accumulate.
    h = jnp.dot(xn.astype(jnp.bfloat16), w1_ref[...].astype(jnp.bfloat16),
                preferred_element_type=jnp.float32) + b1_ref[...]

    # Exact (erf) GELU in f32 -- matches torch nn.GELU() default numerics.
    # Kept f32 on all chips (v5e has no bf16 VPU/EUP path); the tanh approx
    # would move work to the EUP but changes the module's semantics.
    h = 0.5 * h * (1.0 + jax.lax.erf(h * INV_SQRT2))

    # Linear 2 on the MXU.
    y = jnp.dot(h.astype(jnp.bfloat16), w2_ref[...].astype(jnp.bfloat16),
                preferred_element_type=jnp.float32) + b2_ref[...]

    # Dropout(p=0.0) is identity. Single dense store in the caller's dtype.
    o_ref[...] = y.astype(o_ref.dtype)


# ------------------------------------------------------------------
# BlockSpec helpers.
# ------------------------------------------------------------------
def _const_spec(shape, single_buffer):
    # Constant-index operand (weights / biases / LN params): same block every
    # grid step, so a second pipeline buffer is pure VMEM waste.
    n = len(shape)
    idx = lambda *_, n=n: (0,) * n
    if single_buffer:
        return pl.BlockSpec(shape, idx, pipeline_mode=pl.Buffered(1))
    return pl.BlockSpec(shape, idx)


# ------------------------------------------------------------------
# Wrapper: flatten (..., dim) -> (rows, dim), tile rows with a capped tile.
# ------------------------------------------------------------------
def feed_forward(x, params, *, single_buffer_weights=True):
    orig_shape = x.shape
    d = orig_shape[-1]
    hd = params["w1"].shape[1]
    rows = int(math.prod(orig_shape[:-1]))

    # Fold batch/seq into the row (sublane) axis; keep the native dtype
    # (no wrapper-side .astype -> no extra HBM round trip of the activations).
    x2 = x.reshape(rows, d)

    # Capped row tile: all rows in one block when small (grid=(1,) for the toy
    # config; single-TC v5e/v6e gain nothing from extra steps), MAX_BLOCK_ROWS
    # tiles otherwise. Row blocks are independent, so "parallel" semantics.
    block_rows = min(MAX_BLOCK_ROWS, _round_up(rows, 8))
    num_blocks = pl.cdiv(rows, block_rows)
    rows_pad = num_blocks * block_rows
    if rows_pad != rows:
        # Only the ragged tail is padded; no-op whenever block_rows | rows.
        x2 = jnp.pad(x2, ((0, rows_pad - rows), (0, 0)))

    # Explicit VMEM budget (double-buffered row tiles, weights per chosen
    # buffering, f32 intermediates), clamped to stay within v7x's 64 MiB.
    in_bytes = x.dtype.itemsize
    w_bytes = params["w1"].dtype.itemsize
    weight_bufs = 1 if single_buffer_weights else 2
    vmem_est = (
        2 * block_rows * d * in_bytes                      # x tile (2 bufs)
        + 2 * block_rows * d * in_bytes                    # out tile (2 bufs)
        + weight_bufs * (d * hd + hd * d) * w_bytes        # w1 + w2
        + weight_bufs * (3 * d + hd) * 4                   # LN g/b, b1, b2
        + 2 * block_rows * hd * 4                          # f32 (BR,H) interm.
        + 3 * block_rows * d * 4                           # f32 LN/out interm.
    )
    vmem_limit = int(min(max(2 * vmem_est, 32 * 1024 * 1024), 64 * 1024 * 1024))

    out = pl.pallas_call(
        ff_kernel,
        out_shape=jax.ShapeDtypeStruct((rows_pad, d), x.dtype),
        grid=(num_blocks,),
        in_specs=[
            pl.BlockSpec((block_rows, d), lambda i: (i, 0)),
            _const_spec((1, d), single_buffer_weights),    # LN gamma
            _const_spec((1, d), single_buffer_weights),    # LN beta
            _const_spec((d, hd), single_buffer_weights),   # w1
            _const_spec((1, hd), single_buffer_weights),   # b1
            _const_spec((hd, d), single_buffer_weights),   # w2
            _const_spec((1, d), single_buffer_weights),    # b2
        ],
        out_specs=pl.BlockSpec((block_rows, d), lambda i: (i, 0)),
        compiler_params=pltpu.CompilerParams(
            dimension_semantics=("parallel",),
            vmem_limit_bytes=vmem_limit,
        ),
    )(x2, params["g"], params["b"], params["w1"], params["b1"],
      params["w2"], params["b2"])

    return out[:rows].reshape(orig_shape)


# ------------------------------------------------------------------
# Plain-jnp f32 reference (numerical validation only).
# ------------------------------------------------------------------
def feed_forward_ref(x, params):
    xf = x.astype(jnp.float32)
    mu = xf.mean(-1, keepdims=True)
    var = ((xf - mu) ** 2).mean(-1, keepdims=True)
    xn = (xf - mu) / jnp.sqrt(var + EPS) * params["g"] + params["b"]
    hh = xn @ params["w1"] + params["b1"]
    hh = 0.5 * hh * (1.0 + jax.lax.erf(hh * INV_SQRT2))
    return (hh @ params["w2"] + params["b2"]).astype(x.dtype)


# ------------------------------------------------------------------
# Deterministic synthetic parameters.
# ------------------------------------------------------------------
def init_params(key, dim, hidden):
    k1, k2, k3, k4 = jax.random.split(key, 4)
    return {
        "g": jnp.ones((1, dim), jnp.float32),
        "b": jnp.zeros((1, dim), jnp.float32),
        "w1": 0.02 * jax.random.normal(k1, (dim, hidden), jnp.float32),
        "b1": 0.02 * jax.random.normal(k2, (1, hidden), jnp.float32),
        "w2": 0.02 * jax.random.normal(k3, (hidden, dim), jnp.float32),
        "b2": 0.02 * jax.random.normal(k4, (1, dim), jnp.float32),
    }


if __name__ == "__main__":
    key = jax.random.PRNGKey(0)
    k_x, k_p = jax.random.split(key)

    BATCH, SEQ, DIM, HIDDEN = 2, 8, 32, 64     # consistent with the ViT config
    x = jax.random.normal(k_x, (BATCH, SEQ, DIM), jnp.float32)
    params = init_params(k_p, DIM, HIDDEN)

    ff = jax.jit(feed_forward, static_argnames=("single_buffer_weights",))

    # Preferred path: single-buffered constant weight/bias blocks
    # (pl.Buffered(1)).  If this jax/libtpu build rejects that pipeline mode,
    # fall back to default double buffering (identical numerics).
    try:
        out = jax.block_until_ready(ff(x, params, single_buffer_weights=True))
    except Exception:
        out = jax.block_until_ready(ff(x, params, single_buffer_weights=False))

    assert out.shape == (BATCH, SEQ, DIM)

    ref = feed_forward_ref(x, params)
    assert bool(jnp.allclose(out, ref, atol=2e-3, rtol=2e-3)), \
        "Pallas FeedForward mismatch vs jnp reference"

    print("KERNEL_OK")
</pallas_src>

<mosaic_0001>
module attributes {stable_mosaic.version = 11 : i64} {
  func.func @ff_kernel(%arg0: i32, %arg1: memref<16x32xf32, #tpu.memory_space<vmem>>, %arg2: memref<1x32xf32, #tpu.memory_space<vmem>>, %arg3: memref<1x32xf32, #tpu.memory_space<vmem>>, %arg4: memref<32x64xf32, #tpu.memory_space<vmem>>, %arg5: memref<1x64xf32, #tpu.memory_space<vmem>>, %arg6: memref<64x32xf32, #tpu.memory_space<vmem>>, %arg7: memref<1x32xf32, #tpu.memory_space<vmem>>, %arg8: memref<16x32xf32, #tpu.memory_space<vmem>>) attributes {dimension_semantics = [#tpu.dimension_semantics<parallel>], iteration_bounds = array<i64: 1>, scalar_prefetch = 0 : i64, scratch_operands = 0 : i64, tpu.core_type = #tpu.core_type<tc>, window_params = [{transform_indices = @transform_0, window_bounds = array<i64: 16, 32>}, {pipeline_mode = #tpu.pipeline_mode<synchronous>, transform_indices = @transform_1, window_bounds = array<i64: 1, 32>}, {pipeline_mode = #tpu.pipeline_mode<synchronous>, transform_indices = @transform_2, window_bounds = array<i64: 1, 32>}, {pipeline_mode = #tpu.pipeline_mode<synchronous>, transform_indices = @transform_3, window_bounds = array<i64: 32, 64>}, {pipeline_mode = #tpu.pipeline_mode<synchronous>, transform_indices = @transform_4, window_bounds = array<i64: 1, 64>}, {pipeline_mode = #tpu.pipeline_mode<synchronous>, transform_indices = @transform_5, window_bounds = array<i64: 64, 32>}, {pipeline_mode = #tpu.pipeline_mode<synchronous>, transform_indices = @transform_6, window_bounds = array<i64: 1, 32>}, {transform_indices = @transform_7, window_bounds = array<i64: 16, 32>}]} {
    %c0 = arith.constant 0 : index
    %c0_0 = arith.constant 0 : index
    %0 = vector.load %arg1[%c0, %c0_0] : memref<16x32xf32, #tpu.memory_space<vmem>>, vector<16x32xf32>
    %cst = arith.constant dense<0.000000e+00> : vector<16xf32>
    %1 = vector.multi_reduction <add>, %0, %cst [1] : vector<16x32xf32> to vector<16xf32>
    %2 = vector.shape_cast %1 : vector<16xf32> to vector<16x1xf32>
    %cst_1 = arith.constant 3.200000e+01 : f32
    %3 = vector.broadcast %cst_1 : f32 to vector<16x1xf32>
    %4 = arith.divf %2, %3 : vector<16x1xf32>
    %5 = arith.mulf %0, %0 : vector<16x32xf32>
    %cst_2 = arith.constant dense<0.000000e+00> : vector<16xf32>
    %6 = vector.multi_reduction <add>, %5, %cst_2 [1] : vector<16x32xf32> to vector<16xf32>
    %7 = vector.shape_cast %6 : vector<16xf32> to vector<16x1xf32>
    %cst_3 = arith.constant 3.200000e+01 : f32
    %8 = vector.broadcast %cst_3 : f32 to vector<16x1xf32>
    %9 = arith.divf %7, %8 : vector<16x1xf32>
    %10 = arith.mulf %4, %4 : vector<16x1xf32>
    %11 = arith.subf %9, %10 : vector<16x1xf32>
    %cst_4 = arith.constant 0.000000e+00 : f32
    %12 = vector.broadcast %cst_4 : f32 to vector<16x1xf32>
    %13 = arith.maximumf %11, %12 : vector<16x1xf32>
    %14 = vector.broadcast %4 : vector<16x1xf32> to vector<16x32xf32>
    %15 = arith.subf %0, %14 : vector<16x32xf32>
    %cst_5 = arith.constant 9.99999974E-6 : f32
    %16 = vector.broadcast %cst_5 : f32 to vector<16x1xf32>
    %17 = arith.addf %13, %16 : vector<16x1xf32>
    %18 = math.rsqrt %17 : vector<16x1xf32>
    %19 = vector.broadcast %18 : vector<16x1xf32> to vector<16x32xf32>
    %20 = arith.mulf %15, %19 : vector<16x32xf32>
    %c0_6 = arith.constant 0 : index
    %c0_7 = arith.constant 0 : index
    %21 = vector.load %arg2[%c0_6, %c0_7] : memref<1x32xf32, #tpu.memory_space<vmem>>, vector<1x32xf32>
    %22 = vector.broadcast %21 : vector<1x32xf32> to vector<16x32xf32>
    %23 = arith.mulf %20, %22 : vector<16x32xf32>
    %c0_8 = arith.constant 0 : index
    %c0_9 = arith.constant 0 : index
    %24 = vector.load %arg3[%c0_8, %c0_9] : memref<1x32xf32, #tpu.memory_space<vmem>>, vector<1x32xf32>
    %25 = vector.broadcast %24 : vector<1x32xf32> to vector<16x32xf32>
    %26 = arith.addf %23, %25 : vector<16x32xf32>
    %27 = arith.truncf %26 : vector<16x32xf32> to vector<16x32xbf16>
    %c0_10 = arith.constant 0 : index
    %c0_11 = arith.constant 0 : index
    %28 = vector.load %arg4[%c0_10, %c0_11] : memref<32x64xf32, #tpu.memory_space<vmem>>, vector<32x64xf32>
    %29 = arith.truncf %28 : vector<32x64xf32> to vector<32x64xbf16>
    %cst_12 = arith.constant dense<0.000000e+00> : vector<16x64xf32>
    %30 = tpu.matmul %27, %29, %cst_12 {dimension_numbers = #tpu.dot_dimension_numbers<[1], [0], [0], [1], [0, 0, 1, 1], [], []>} : vector<16x32xbf16>, vector<32x64xbf16>, vector<16x64xf32> -> vector<16x64xf32>
    %c0_13 = arith.constant 0 : index
    %c0_14 = arith.constant 0 : index
    %31 = vector.load %arg5[%c0_13, %c0_14] : memref<1x64xf32, #tpu.memory_space<vmem>>, vector<1x64xf32>
    %32 = vector.broadcast %31 : vector<1x64xf32> to vector<16x64xf32>
    %33 = arith.addf %30, %32 : vector<16x64xf32>
    %cst_15 = arith.constant 5.000000e-01 : f32
    %34 = vector.broadcast %cst_15 : f32 to vector<16x64xf32>
    %35 = arith.mulf %34, %33 : vector<16x64xf32>
    %cst_16 = arith.constant 0.707106769 : f32
    %36 = vector.broadcast %cst_16 : f32 to vector<16x64xf32>
    %37 = arith.mulf %33, %36 : vector<16x64xf32>
    %38 = math.erf %37 : vector<16x64xf32>
    %cst_17 = arith.constant 1.000000e+00 : f32
    %39 = vector.broadcast %cst_17 : f32 to vector<16x64xf32>
    %40 = arith.addf %39, %38 : vector<16x64xf32>
    %41 = arith.mulf %35, %40 : vector<16x64xf32>
    %42 = arith.truncf %41 : vector<16x64xf32> to vector<16x64xbf16>
    %c0_18 = arith.constant 0 : index
    %c0_19 = arith.constant 0 : index
    %43 = vector.load %arg6[%c0_18, %c0_19] : memref<64x32xf32, #tpu.memory_space<vmem>>, vector<64x32xf32>
    %44 = arith.truncf %43 : vector<64x32xf32> to vector<64x32xbf16>
    %cst_20 = arith.constant dense<0.000000e+00> : vector<16x32xf32>
    %45 = tpu.matmul %42, %44, %cst_20 {dimension_numbers = #tpu.dot_dimension_numbers<[1], [0], [0], [1], [0, 0, 1, 1], [], []>} : vector<16x64xbf16>, vector<64x32xbf16>, vector<16x32xf32> -> vector<16x32xf32>
    %c0_21 = arith.constant 0 : index
    %c0_22 = arith.constant 0 : index
    %46 = vector.load %arg7[%c0_21, %c0_22] : memref<1x32xf32, #tpu.memory_space<vmem>>, vector<1x32xf32>
    %47 = vector.broadcast %46 : vector<1x32xf32> to vector<16x32xf32>
    %48 = arith.addf %45, %47 : vector<16x32xf32>
    %c0_23 = arith.constant 0 : index
    %c0_24 = arith.constant 0 : index
    %49 = vector.load %arg8[%c0_23, %c0_24] : memref<16x32xf32, #tpu.memory_space<vmem>>, vector<16x32xf32>
    tpu.vector_store %arg8[%c0_23, %c0_24], %48 {strides = array<i32>} : memref<16x32xf32, #tpu.memory_space<vmem>>, vector<16x32xf32>,
    return
  }
  func.func @transform_0(%arg0: i32) -> (i32, i32) {
    %c0_i32 = arith.constant 0 : i32
    %c0_i32_0 = arith.constant 0 : i32
    return %arg0, %c0_i32 : i32, i32
  }
  func.func @transform_1(%arg0: i32) -> (i32, i32) {
    %c0_i32 = arith.constant 0 : i32
    %c0_i32_0 = arith.constant 0 : i32
    %c0_i32_1 = arith.constant 0 : i32
    return %c0_i32, %c0_i32_0 : i32, i32
  }
  func.func @transform_2(%arg0: i32) -> (i32, i32) {
    %c0_i32 = arith.constant 0 : i32
    %c0_i32_0 = arith.constant 0 : i32
    %c0_i32_1 = arith.constant 0 : i32
    return %c0_i32, %c0_i32_0 : i32, i32
  }
  func.func @transform_3(%arg0: i32) -> (i32, i32) {
    %c0_i32 = arith.constant 0 : i32
    %c0_i32_0 = arith.constant 0 : i32
    %c0_i32_1 = arith.constant 0 : i32
    return %c0_i32, %c0_i32_0 : i32, i32
  }
  func.func @transform_4(%arg0: i32) -> (i32, i32) {
    %c0_i32 = arith.constant 0 : i32
    %c0_i32_0 = arith.constant 0 : i32
    %c0_i32_1 = arith.constant 0 : i32
    return %c0_i32, %c0_i32_0 : i32, i32
  }
  func.func @transform_5(%arg0: i32) -> (i32, i32) {
    %c0_i32 = arith.constant 0 : i32
    %c0_i32_0 = arith.constant 0 : i32
    %c0_i32_1 = arith.constant 0 : i32
    return %c0_i32, %c0_i32_0 : i32, i32
  }
  func.func @transform_6(%arg0: i32) -> (i32, i32) {
    %c0_i32 = arith.constant 0 : i32
    %c0_i32_0 = arith.constant 0 : i32
    %c0_i32_1 = arith.constant 0 : i32
    return %c0_i32, %c0_i32_0 : i32, i32
  }
  func.func @transform_7(%arg0: i32) -> (i32, i32) {
    %c0_i32 = arith.constant 0 : i32
    %c0_i32_0 = arith.constant 0 : i32
    return %arg0, %c0_i32 : i32, i32
  }
}

module attributes {stable_mosaic.version = 11 : i64} {
  func.func @ff_kernel(%arg0: i32, %arg1: memref<16x32xf32, #tpu.memory_space<vmem>>, %arg2: memref<1x32xf32, #tpu.memory_space<vmem>>, %arg3: memref<1x32xf32, #tpu.memory_space<vmem>>, %arg4: memref<32x64xf32, #tpu.memory_space<vmem>>, %arg5: memref<1x64xf32, #tpu.memory_space<vmem>>, %arg6: memref<64x32xf32, #tpu.memory_space<vmem>>, %arg7: memref<1x32xf32, #tpu.memory_space<vmem>>, %arg8: memref<16x32xf32, #tpu.memory_space<vmem>>) attributes {dimension_semantics = [#tpu.dimension_semantics<parallel>], iteration_bounds = array<i64: 1>, scalar_prefetch = 0 : i64, scratch_operands = 0 : i64, tpu.core_type = #tpu.core_type<tc>, window_params = [{transform_indices = @transform_0, window_bounds = array<i64: 16, 32>}, {pipeline_mode = #tpu.pipeline_mode<synchronous>, transform_indices = @transform_1, window_bounds = array<i64: 1, 32>}, {pipeline_mode = #tpu.pipeline_mode<synchronous>, transform_indices = @transform_2, window_bounds = array<i64: 1, 32>}, {pipeline_mode = #tpu.pipeline_mode<synchronous>, transform_indices = @transform_3, window_bounds = array<i64: 32, 64>}, {pipeline_mode = #tpu.pipeline_mode<synchronous>, transform_indices = @transform_4, window_bounds = array<i64: 1, 64>}, {pipeline_mode = #tpu.pipeline_mode<synchronous>, transform_indices = @transform_5, window_bounds = array<i64: 64, 32>}, {pipeline_mode = #tpu.pipeline_mode<synchronous>, transform_indices = @transform_6, window_bounds = array<i64: 1, 32>}, {transform_indices = @transform_7, window_bounds = array<i64: 16, 32>}]} {
    %c0 = arith.constant 0 : index
    %c0_0 = arith.constant 0 : index
    %0 = vector.load %arg1[%c0, %c0_0] : memref<16x32xf32, #tpu.memory_space<vmem>>, vector<16x32xf32>
    %cst = arith.constant dense<0.000000e+00> : vector<16xf32>
    %1 = vector.multi_reduction <add>, %0, %cst [1] : vector<16x32xf32> to vector<16xf32>
    %2 = vector.shape_cast %1 : vector<16xf32> to vector<16x1xf32>
    %cst_1 = arith.constant 3.200000e+01 : f32
    %3 = vector.broadcast %cst_1 : f32 to vector<16x1xf32>
    %4 = arith.divf %2, %3 : vector<16x1xf32>
    %5 = arith.mulf %0, %0 : vector<16x32xf32>
    %cst_2 = arith.constant dense<0.000000e+00> : vector<16xf32>
    %6 = vector.multi_reduction <add>, %5, %cst_2 [1] : vector<16x32xf32> to vector<16xf32>
    %7 = vector.shape_cast %6 : vector<16xf32> to vector<16x1xf32>
    %cst_3 = arith.constant 3.200000e+01 : f32
    %8 = vector.broadcast %cst_3 : f32 to vector<16x1xf32>
    %9 = arith.divf %7, %8 : vector<16x1xf32>
    %10 = arith.mulf %4, %4 : vector<16x1xf32>
    %11 = arith.subf %9, %10 : vector<16x1xf32>
    %cst_4 = arith.constant 0.000000e+00 : f32
    %12 = vector.broadcast %cst_4 : f32 to vector<16x1xf32>
    %13 = arith.maximumf %11, %12 : vector<16x1xf32>
    %14 = vector.broadcast %4 : vector<16x1xf32> to vector<16x32xf32>
    %15 = arith.subf %0, %14 : vector<16x32xf32>
    %cst_5 = arith.constant 9.99999974E-6 : f32
    %16 = vector.broadcast %cst_5 : f32 to vector<16x1xf32>
    %17 = arith.addf %13, %16 : vector<16x1xf32>
    %18 = math.rsqrt %17 : vector<16x1xf32>
    %19 = vector.broadcast %18 : vector<16x1xf32> to vector<16x32xf32>
    %20 = arith.mulf %15, %19 : vector<16x32xf32>
    %c0_6 = arith.constant 0 : index
    %c0_7 = arith.constant 0 : index
    %21 = vector.load %arg2[%c0_6, %c0_7] : memref<1x32xf32, #tpu.memory_space<vmem>>, vector<1x32xf32>
    %22 = vector.broadcast %21 : vector<1x32xf32> to vector<16x32xf32>
    %23 = arith.mulf %20, %22 : vector<16x32xf32>
    %c0_8 = arith.constant 0 : index
    %c0_9 = arith.constant 0 : index
    %24 = vector.load %arg3[%c0_8, %c0_9] : memref<1x32xf32, #tpu.memory_space<vmem>>, vector<1x32xf32>
    %25 = vector.broadcast %24 : vector<1x32xf32> to vector<16x32xf32>
    %26 = arith.addf %23, %25 : vector<16x32xf32>
    %27 = arith.truncf %26 : vector<16x32xf32> to vector<16x32xbf16>
    %c0_10 = arith.constant 0 : index
    %c0_11 = arith.constant 0 : index
    %28 = vector.load %arg4[%c0_10, %c0_11] : memref<32x64xf32, #tpu.memory_space<vmem>>, vector<32x64xf32>
    %29 = arith.truncf %28 : vector<32x64xf32> to vector<32x64xbf16>
    %cst_12 = arith.constant dense<0.000000e+00> : vector<16x64xf32>
    %30 = tpu.matmul %27, %29, %cst_12 {dimension_numbers = #tpu.dot_dimension_numbers<[1], [0], [0], [1], [0, 0, 1, 1], [], []>} : vector<16x32xbf16>, vector<32x64xbf16>, vector<16x64xf32> -> vector<16x64xf32>
    %c0_13 = arith.constant 0 : index
    %c0_14 = arith.constant 0 : index
    %31 = vector.load %arg5[%c0_13, %c0_14] : memref<1x64xf32, #tpu.memory_space<vmem>>, vector<1x64xf32>
    %32 = vector.broadcast %31 : vector<1x64xf32> to vector<16x64xf32>
    %33 = arith.addf %30, %32 : vector<16x64xf32>
    %cst_15 = arith.constant 5.000000e-01 : f32
    %34 = vector.broadcast %cst_15 : f32 to vector<16x64xf32>
    %35 = arith.mulf %34, %33 : vector<16x64xf32>
    %cst_16 = arith.constant 0.707106769 : f32
    %36 = vector.broadcast %cst_16 : f32 to vector<16x64xf32>
    %37 = arith.mulf %33, %36 : vector<16x64xf32>
    %38 = math.erf %37 : vector<16x64xf32>
    %cst_17 = arith.constant 1.000000e+00 : f32
    %39 = vector.broadcast %cst_17 : f32 to vector<16x64xf32>
    %40 = arith.addf %39, %38 : vector<16x64xf32>
    %41 = arith.mulf %35, %40 : vector<16x64xf32>
    %42 = arith.truncf %41 : vector<16x64xf32> to vector<16x64xbf16>
    %c0_18 = arith.constant 0 : index
    %c0_19 = arith.constant 0 : index
    %43 = vector.load %arg6[%c0_18, %c0_19] : memref<64x32xf32, #tpu.memory_space<vmem>>, vector<64x32xf32>
    %44 = arith.truncf %43 : vector<64x32xf32> to vector<64x32xbf16>
    %cst_20 = arith.constant dense<0.000000e+00> : vector<16x32xf32>
    %45 = tpu.matmul %42, %44, %cst_20 {dimension_numbers = #tpu.dot_dimension_numbers<[1], [0], [0], [1], [0, 0, 1, 1], [], []>} : vector<16x64xbf16>, vector<64x32xbf16>, vector<16x32xf32> -> vector<16x32xf32>
    %c0_21 = arith.constant 0 : index
    %c0_22 = arith.constant 0 : index
    %46 = vector.load %arg7[%c0_21, %c0_22] : memref<1x32xf32, #tpu.memory_space<vmem>>, vector<1x32xf32>
    %47 = vector.broadcast %46 : vector<1x32xf32> to vector<16x32xf32>
    %48 = arith.addf %45, %47 : vector<16x32xf32>
    %c0_23 = arith.constant 0 : index
    %c0_24 = arith.constant 0 : index
    %49 = vector.load %arg8[%c0_23, %c0_24] : memref<16x32xf32, #tpu.memory_space<vmem>>, vector<16x32xf32>
    tpu.vector_store %arg8[%c0_23, %c0_24], %48 {strides = array<i32>} : memref<16x32xf32, #tpu.memory_space<vmem>>, vector<16x32xf32>,
    return
  }
  func.func @transform_0(%arg0: i32) -> (i32, i32) {
    %c0_i32 = arith.constant 0 : i32
    %c0_i32_0 = arith.constant 0 : i32
    return %arg0, %c0_i32 : i32, i32
  }
  func.func @transform_1(%arg0: i32) -> (i32, i32) {
    %c0_i32 = arith.constant 0 : i32
    %c0_i32_0 = arith.constant 0 : i32
    %c0_i32_1 = arith.constant 0 : i32
    return %c0_i32, %c0_i32_0 : i32, i32
  }
  func.func @transform_2(%arg0: i32) -> (i32, i32) {
    %c0_i32 = arith.constant 0 : i32
    %c0_i32_0 = arith.constant 0 : i32
    %c0_i32_1 = arith.constant 0 : i32
    return %c0_i32, %c0_i32_0 : i32, i32
  }
  func.func @transform_3(%arg0: i32) -> (i32, i32) {
    %c0_i32 = arith.constant 0 : i32
    %c0_i32_0 = arith.constant 0 : i32
    %c0_i32_1 = arith.constant 0 : i32
    return %c0_i32, %c0_i32_0 : i32, i32
  }
  func.func @transform_4(%arg0: i32) -> (i32, i32) {
    %c0_i32 = arith.constant 0 : i32
    %c0_i32_0 = arith.constant 0 : i32
    %c0_i32_1 = arith.constant 0 : i32
    return %c0_i32, %c0_i32_0 : i32, i32
  }
  func.func @transform_5(%arg0: i32) -> (i32, i32) {
    %c0_i32 = arith.constant 0 : i32
    %c0_i32_0 = arith.constant 0 : i32
    %c0_i32_1 = arith.constant 0 : i32
    return %c0_i32, %c0_i32_0 : i32, i32
  }
  func.func @transform_6(%arg0: i32) -> (i32, i32) {
    %c0_i32 = arith.constant 0 : i32
    %c0_i32_0 = arith.constant 0 : i32
    %c0_i32_1 = arith.constant 0 : i32
    return %c0_i32, %c0_i32_0 : i32, i32
  }
  func.func @transform_7(%arg0: i32) -> (i32, i32) {
    %c0_i32 = arith.constant 0 : i32
    %c0_i32_0 = arith.constant 0 : i32
    return %arg0, %c0_i32 : i32, i32
  }
}

</mosaic_0001>

<llo_original>
// kernel: feed_forward.1
$region0: #{feed_forward.1}
  #allocation0 [shape = 'u32[]', space=smem, size = 0x4, offset = 0x4, fixed_abs, tag = 'smem constant byte address 0x4 - core index']
  #allocation1 [shape = 'u32[72,128]{1,0:T(1,128)}', space=vmem, size = 0x9000, scoped, tag = 'internal scratch']
  %s0 = inlined_call_operand.vmem [shape: f32[16,32], index: 0, kind: input, shape index: {}]
  %s1 = inlined_call_operand.vmem [shape: f32[1,32], index: 1, kind: input, shape index: {}]
  %s2 = inlined_call_operand.vmem [shape: f32[1,32], index: 2, kind: input, shape index: {}]
  %s3 = inlined_call_operand.vmem [shape: f32[32,64], index: 3, kind: input, shape index: {}]
  %s4 = inlined_call_operand.vmem [shape: f32[1,64], index: 4, kind: input, shape index: {}]
  %s5 = inlined_call_operand.vmem [shape: f32[64,32], index: 5, kind: input, shape index: {}]
  %s6 = inlined_call_operand.vmem [shape: f32[1,32], index: 6, kind: input, shape index: {}]
  %s7 = inlined_call_operand.hbm [shape: f32[16,32], index: 7, kind: output, shape index: {}]
  %s8 = sld [smem:[#allocation0]]
  $region38: #{feed_forward.1} parent=0
    _
  %s10 = ssub.s32 1, %s8
  %s11 = scalar_select 0, %s10, %s8
  $region1: #{feed_forward.1} parent=0
    #allocation2 [shape = 'u8[8192]{0}', space=vmem, size = 0x2000, scoped, tag = 'output window, operand 0, single buffered']
    #allocation3 [shape = 's32[1]{0}', space=sflag, size = 0x4, scoped, tag = 'scoped memory for feed_forward.1']
    %12 = vsyncpa [#allocation3], 0
    // Predicated region
    $region2: #{feed_forward.1} parent=1 // pred_check
      _
    $region3: #{feed_forward.1} parent=1 // pred_check_branch
      %14 = sbr.rel (0) target = $region5
    $region4: #{feed_forward.1} parent=1 // pred_region
      _
    $region5: #{feed_forward.1} parent=1 // pred_fallthru
      _
    // Predicated region
    $region6: #{feed_forward.1} parent=1 // pred_check
      _
    $region7: #{feed_forward.1} parent=1 // pred_check_branch
      %16 = sbr.rel (0) target = $region9
    $region8: #{feed_forward.1} parent=1 // pred_region
      _
    $region9: #{feed_forward.1} parent=1 // pred_fallthru
      _
    // Predicated region
    $region10: #{feed_forward.1} parent=1 // pred_check
      _
    $region11: #{feed_forward.1} parent=1 // pred_check_branch
      %18 = sbr.rel (0) target = $region13
    $region12: #{feed_forward.1} parent=1 // pred_region
      _
    $region13: #{feed_forward.1} parent=1 // pred_fallthru
      _
    // Predicated region
    $region14: #{feed_forward.1} parent=1 // pred_check
      _
    $region15: #{feed_forward.1} parent=1 // pred_check_branch
      %20 = sbr.rel (0) target = $region17
    $region16: #{feed_forward.1} parent=1 // pred_region
      _
    $region17: #{feed_forward.1} parent=1 // pred_fallthru
      _
    // Predicated region
    $region18: #{feed_forward.1} parent=1 // pred_check
      _
    $region19: #{feed_forward.1} parent=1 // pred_check_branch
      %22 = sbr.rel (0) target = $region21
    $region20: #{feed_forward.1} parent=1 // pred_region
      _
    $region21: #{feed_forward.1} parent=1 // pred_fallthru
      _
    // Predicated region
    $region22: #{feed_forward.1} parent=1 // pred_check
      _
    $region23: #{feed_forward.1} parent=1 // pred_check_branch
      %24 = sbr.rel (0) target = $region25
    $region24: #{feed_forward.1} parent=1 // pred_region
      _
    $region25: #{feed_forward.1} parent=1 // pred_fallthru
      _
    // Predicated region
    $region26: #{feed_forward.1} parent=1 // pred_check
      _
    $region27: #{feed_forward.1} parent=1 // pred_check_branch
      %26 = sbr.rel (0) target = $region29
    $region28: #{feed_forward.1} parent=1 // pred_region
      _
    $region29: #{feed_forward.1} parent=1 // pred_fallthru
      _
    %v28 = vld [vmem:[%s0] sm:$0xff]
    %v29 = vld [vmem:[%s0 + $0x8] sm:$0xff]
    %vm30 = vcmask 261120
    %v31 = vsel %vm30, %v28, 0.0
    %32 = vadd.xlane.f32.xlu0 %v31
    %v33 = vpop.xlane.xlu0 %32
    %v34 = vsel %vm30, %v29, 0.0
    %35 = vadd.xlane.f32.xlu0 %v34
    %v36 = vpop.xlane.xlu0 %35
    %v37 = vrcp.pop 32.0
    %v38 = vmul.f32 32.0, %v37
    %v39 = vsub.f32 1.0, %v38
    %v40 = vmul.f32 %v37, %v39
    %v41 = vadd.f32 %v37, %v40
    %vm42 = vweird.f32 %v37
    %v43 = vsel %vm42, %v37, %v41
    %v44 = vmul.f32 %v33, %v43
    %v45 = vmul.f32 %v36, %v43
    %v46 = vmul.f32 %v28, %v28
    %v47 = vmul.f32 %v29, %v29
    %v48 = vsel %vm30, %v46, 0.0
    %49 = vadd.xlane.f32.xlu0 %v48
    %v50 = vpop.xlane.xlu0 %49
    %v51 = vsel %vm30, %v47, 0.0
    %52 = vadd.xlane.f32.xlu0 %v51
    %v53 = vpop.xlane.xlu0 %52
    %v54 = vmul.f32 %v50, %v43
    %v55 = vmul.f32 %v53, %v43
    %v56 = vmul.f32 %v44, %v44
    %v57 = vmul.f32 %v45, %v45
    %v58 = vsub.f32 %v54, %v56
    %v59 = vsub.f32 %v55, %v57
    %v60 = vmax.f32 %v58, 0.0
    %v61 = vmax.f32 %v59, 0.0
    %v62 = vsub.f32 %v28, %v44
    %v63 = vsub.f32 %v29, %v45
    %v64 = vadd.f32 %v60, 1e-05
    %v65 = vadd.f32 %v61, 1e-05
    %v66 = vrsqrt.pop %v64
    %v67 = vmul.f32 %v66, %v64
    %v68 = vmul.f32 %v67, %v66
    %v69 = vmul.f32 0.5, %v68
    %v70 = vsub.f32 1.5, %v69
    %v71 = vmul.f32 %v66, %v70
    %vm72 = vweird.f32 %v64
    %vm73 = vweird.f32 %v66
    %vm74 = vmor %vm72, %vm73
    %v75 = vsel %vm74, %v66, %v71
    %v76 = vrsqrt.pop %v65
    %v77 = vmul.f32 %v76, %v65
    %v78 = vmul.f32 %v77, %v76
    %v79 = vmul.f32 0.5, %v78
    %v80 = vsub.f32 1.5, %v79
    %v81 = vmul.f32 %v76, %v80
    %vm82 = vweird.f32 %v65
    %vm83 = vweird.f32 %v76
    %vm84 = vmor %vm82, %vm83
    %v85 = vsel %vm84, %v76, %v81
    %v86 = vmul.f32 %v62, %v75
    %v87 = vmul.f32 %v63, %v85
    %v88 = vld [vmem:[%s1] sm:$0x1]
    %v90 = vperm.slane %v88, 0
    %v92 = vmul.f32 %v86, %v90
    %v93 = vmul.f32 %v87, %v90
    %v94 = vld [vmem:[%s2] sm:$0x1]
    %v96 = vperm.slane %v94, 0
    %v98 = vadd.f32 %v92, %v96
    %v99 = vadd.f32 %v93, %v96
    %v100 = vpack.c.bf16 %v99, %v98
    %v101 = vld [vmem:[%s3] sm:$0xff]
    %v102 = vld [vmem:[%s3 + $0x8] sm:$0xff]
    %v103 = vld [vmem:[%s3 + $0x10] sm:$0xff]
    %v104 = vld [vmem:[%s3 + $0x18] sm:$0xff]
    %v105 = vpack.c.bf16 %v102, %v101
    %v106 = vpack.c.bf16 %v104, %v103
    %v107 = vld [vmem:[%s4] sm:$0x1]
    %v109 = vperm.slane %v107, 0
    %v112 = vsel %vm30, %v100, 0
    %114 = vmatpush.bf16.msra.mxu0 0
    %115 = vmatpush.bf16.msra.mxu0 0
    %116 = vmatpush.bf16.msra.mxu0 0
    %117 = vmatpush.bf16.msra.mxu0 0
    %118 = vmatpush.bf16.msra.mxu0 0
    %119 = vmatpush.bf16.msra.mxu0 0
    %120 = vmatpush.bf16.msra.mxu0 %v106
    %121 = vmatpush.bf16.msra.mxu0 %v105
    %122 = vmatmul.bf16.gmra.mxu0 %v112
    %v123 = vpop.f32.mrf.mxu0
    %v124 = vadd.f32 %v109, %v123
    %v125 = vpop.f32.mrf.mxu0
    %v126 = vadd.f32 %v109, %v125
    %127 = vdwg.mxu0
    %v128 = vmul.f32 %v124, 0.5
    %v129 = vmul.f32 %v126, 0.5
    %v130 = vmul.f32 %v124, 0.70710677
    %v131 = vmul.f32 %v126, 0.70710677
    %v132 = vmul.f32 %v130, %v130
    %v133 = vmin.f32 16.0, %v132
    %v134 = vmul.f32 %v133, 2.1237322e-06
    %v135 = vadd.f32 %v134, 0.00028619796
    %v136 = vmul.f32 %v133, %v135
    %v137 = vadd.f32 %v136, 0.0036580483
    %v138 = vmul.f32 %v133, %v137
    %v139 = vadd.f32 %v138, 0.05243302
    %v140 = vmul.f32 %v133, %v139
    %v141 = vadd.f32 %v140, 0.18741608
    %v142 = vmul.f32 %v133, %v141
    %v143 = vadd.f32 %v142, 1.1283791
    %v144 = vmul.f32 %v130, %v143
    %v145 = vmul.f32 %v133, 3.8918573e-05
    %v146 = vadd.f32 %v145, 0.001143296
    %v147 = vmul.f32 %v133, %v146
    %v148 = vadd.f32 %v147, 0.014752088
    %v149 = vmul.f32 %v133, %v148
    %v150 = vadd.f32 %v149, 0.112945676
    %v151 = vmul.f32 %v133, %v150
    %v152 = vadd.f32 %v151, 0.4994258
    %v153 = vmul.f32 %v133, %v152
    %v154 = vadd.f32 %v153, 1.0
    %v155 = vrcp.pop %v154
    %v156 = vmul.f32 %v154, %v155
    %v157 = vsub.f32 1.0, %v156
    %v158 = vmul.f32 %v155, %v157
    %v159 = vadd.f32 %v155, %v158
    %vm160 = vweird.f32 %v154
    %vm161 = vweird.f32 %v155
    %vm162 = vmor %vm160, %vm161
    %v163 = vsel %vm162, %v155, %v159
    %v164 = vand.u32 2147483647, %v154
    %vm165 = vcmp.eq.f32.partialorder %v164, 8.507059e+37
    %v166 = vand.u32 %v154, 2147483648
    %v167 = vor.u32 1.1754944e-38, %v166
    %v168 = vsel %vm165, %v167, %v163
    %v169 = vmul.f32 %v144, %v168
    %v170 = vmin.f32 %v169, 1.0
    %v171 = vmax.f32 %v170, -1.0
    %v172 = vmul.f32 %v131, %v131
    %v173 = vmin.f32 16.0, %v172
    %v174 = vmul.f32 %v173, 2.1237322e-06
    %v175 = vadd.f32 %v174, 0.00028619796
    %v176 = vmul.f32 %v173, %v175
    %v177 = vadd.f32 %v176, 0.0036580483
    %v178 = vmul.f32 %v173, %v177
    %v179 = vadd.f32 %v178, 0.05243302
    %v180 = vmul.f32 %v173, %v179
    %v181 = vadd.f32 %v180, 0.18741608
    %v182 = vmul.f32 %v173, %v181
    %v183 = vadd.f32 %v182, 1.1283791
    %v184 = vmul.f32 %v131, %v183
    %v185 = vmul.f32 %v173, 3.8918573e-05
    %v186 = vadd.f32 %v185, 0.001143296
    %v187 = vmul.f32 %v173, %v186
    %v188 = vadd.f32 %v187, 0.014752088
    %v189 = vmul.f32 %v173, %v188
    %v190 = vadd.f32 %v189, 0.112945676
    %v191 = vmul.f32 %v173, %v190
    %v192 = vadd.f32 %v191, 0.4994258
    %v193 = vmul.f32 %v173, %v192
    %v194 = vadd.f32 %v193, 1.0
    %v195 = vrcp.pop %v194
    %v196 = vmul.f32 %v194, %v195
    %v197 = vsub.f32 1.0, %v196
    %v198 = vmul.f32 %v195, %v197
    %v199 = vadd.f32 %v195, %v198
    %vm200 = vweird.f32 %v194
    %vm201 = vweird.f32 %v195
    %vm202 = vmor %vm200, %vm201
    %v203 = vsel %vm202, %v195, %v199
    %v204 = vand.u32 2147483647, %v194
    %vm205 = vcmp.eq.f32.partialorder %v204, 8.507059e+37
    %v206 = vand.u32 %v194, 2147483648
    %v207 = vor.u32 1.1754944e-38, %v206
    %v208 = vsel %vm205, %v207, %v203
    %v209 = vmul.f32 %v184, %v208
    %v210 = vmin.f32 %v209, 1.0
    %v211 = vmax.f32 %v210, -1.0
    %v212 = vadd.f32 %v171, 1.0
    %v213 = vadd.f32 %v211, 1.0
    %v214 = vmul.f32 %v128, %v212
    %v215 = vmul.f32 %v129, %v213
    %v216 = vpack.c.bf16 %v215, %v214
    %v217 = vld [vmem:[%s5] sm:$0xff]
    %v218 = vld [vmem:[%s5 + $0x8] sm:$0xff]
    %v219 = vld [vmem:[%s5 + $0x10] sm:$0xff]
    %v220 = vld [vmem:[%s5 + $0x18] sm:$0xff]
    %v221 = vld [vmem:[%s5 + $0x20] sm:$0xff]
    %v222 = vld [vmem:[%s5 + $0x28] sm:$0xff]
    %v223 = vld [vmem:[%s5 + $0x30] sm:$0xff]
    %v224 = vld [vmem:[%s5 + $0x38] sm:$0xff]
    %v225 = vpack.c.bf16 %v218, %v217
    %v226 = vpack.c.bf16 %v220, %v219
    %v227 = vpack.c.bf16 %v222, %v221
    %v228 = vpack.c.bf16 %v224, %v223
    %v229 = vld [vmem:[%s6] sm:$0x1]
    %v231 = vperm.slane %v229, 0
    %vm233 = vcmask 523264
    %v235 = vsel %vm233, %v216, 0
    %237 = vmatpush.bf16.msra.mxu0 0
    %238 = vmatpush.bf16.msra.mxu0 0
    %239 = vmatpush.bf16.msra.mxu0 0
    %240 = vmatpush.bf16.msra.mxu0 0
    %241 = vmatpush.bf16.msra.mxu0 %v228
    %242 = vmatpush.bf16.msra.mxu0 %v227
    %243 = vmatpush.bf16.msra.mxu0 %v226
    %244 = vmatpush.bf16.msra.mxu0 %v225
    %245 = vmatmul.bf16.gmra.mxu0 %v235
    %v246 = vpop.f32.mrf.mxu0
    %v247 = vadd.f32 %v231, %v246
    %v248 = vpop.f32.mrf.mxu0
    %v249 = vadd.f32 %v231, %v248
    %250 = vdwg.mxu0
    %251 = vst.msk [vmem:[#allocation2] sm:$0xff] %vm30, %v247
    %252 = vst.msk [vmem:[#allocation2 + $0x8] sm:$0xff] %vm30, %v249
    // Predicated region
    $region30: #{feed_forward.1} parent=1 // pred_check
      _
    $region31: #{feed_forward.1} parent=1 // pred_check_branch
      %254 = sbr.rel (0) target = $region33
    $region32: #{feed_forward.1} parent=1 // pred_region
      %256 = vsyncadd [#allocation3], 0
      %s257 = sshll.u32 [#allocation2], 4
      %s258 = int_to_ptr.vmem [resolvable:$true] %s257
      %s259 = sshll.u32 %s7, 4
      %s260 = int_to_ptr.hbm [resolvable:$true] %s259
      %265 = dma.vmem_to_hbm [thread:$0]  %s258, 256, %s260, [#allocation3], 128, 128, 8
    $region33: #{feed_forward.1} parent=1 // pred_fallthru
      _
    // Predicated region
    $region34: #{feed_forward.1} parent=1 // pred_check
      _
    $region35: #{feed_forward.1} parent=1 // pred_check_branch
      %267 = sbr.rel (0) target = $region37
    $region36: #{feed_forward.1} parent=1 // pred_region
      %269 = dma.done [#allocation3], 256
    $region37: #{feed_forward.1} parent=1 // pred_fallthru
      _
    %270 = vsyncpa [#allocation3], 1

// kernel: feed_forward.1
$region0: #{feed_forward.1}
  #allocation0 [shape = 'u32[]', space=smem, size = 0x4, offset = 0x4, fixed_abs, tag = 'smem constant byte address 0x4 - core index']
  #allocation1 [shape = 'u32[72,128]{1,0:T(1,128)}', space=vmem, size = 0x9000, scoped, tag = 'internal scratch']
  %s0 = inlined_call_operand.vmem [shape: f32[16,32], index: 0, kind: input, shape index: {}]
  %s1 = inlined_call_operand.vmem [shape: f32[1,32], index: 1, kind: input, shape index: {}]
  %s2 = inlined_call_operand.vmem [shape: f32[1,32], index: 2, kind: input, shape index: {}]
  %s3 = inlined_call_operand.vmem [shape: f32[32,64], index: 3, kind: input, shape index: {}]
  %s4 = inlined_call_operand.vmem [shape: f32[1,64], index: 4, kind: input, shape index: {}]
  %s5 = inlined_call_operand.vmem [shape: f32[64,32], index: 5, kind: input, shape index: {}]
  %s6 = inlined_call_operand.vmem [shape: f32[1,32], index: 6, kind: input, shape index: {}]
  %s7 = inlined_call_operand.hbm [shape: f32[16,32], index: 7, kind: output, shape index: {}]
  %s8 = sld [smem:[#allocation0]]
  $region38: #{feed_forward.1} parent=0
    _
  %s10 = ssub.s32 1, %s8
  %s11 = scalar_select 0, %s10, %s8
  $region1: #{feed_forward.1} parent=0
    #allocation2 [shape = 'u8[8192]{0}', space=vmem, size = 0x2000, scoped, tag = 'output window, operand 0, single buffered']
    #allocation3 [shape = 's32[1]{0}', space=sflag, size = 0x4, scoped, tag = 'scoped memory for feed_forward.1']
    %12 = vsyncpa [#allocation3], 0
    // Predicated region
    $region2: #{feed_forward.1} parent=1 // pred_check
      _
    $region3: #{feed_forward.1} parent=1 // pred_check_branch
      %14 = sbr.rel (0) target = $region5
    $region4: #{feed_forward.1} parent=1 // pred_region
      _
    $region5: #{feed_forward.1} parent=1 // pred_fallthru
      _
    // Predicated region
    $region6: #{feed_forward.1} parent=1 // pred_check
      _
    $region7: #{feed_forward.1} parent=1 // pred_check_branch
      %16 = sbr.rel (0) target = $region9
    $region8: #{feed_forward.1} parent=1 // pred_region
      _
    $region9: #{feed_forward.1} parent=1 // pred_fallthru
      _
    // Predicated region
    $region10: #{feed_forward.1} parent=1 // pred_check
      _
    $region11: #{feed_forward.1} parent=1 // pred_check_branch
      %18 = sbr.rel (0) target = $region13
    $region12: #{feed_forward.1} parent=1 // pred_region
      _
    $region13: #{feed_forward.1} parent=1 // pred_fallthru
      _
    // Predicated region
    $region14: #{feed_forward.1} parent=1 // pred_check
      _
    $region15: #{feed_forward.1} parent=1 // pred_check_branch
      %20 = sbr.rel (0) target = $region17
    $region16: #{feed_forward.1} parent=1 // pred_region
      _
    $region17: #{feed_forward.1} parent=1 // pred_fallthru
      _
    // Predicated region
    $region18: #{feed_forward.1} parent=1 // pred_check
      _
    $region19: #{feed_forward.1} parent=1 // pred_check_branch
      %22 = sbr.rel (0) target = $region21
    $region20: #{feed_forward.1} parent=1 // pred_region
      _
    $region21: #{feed_forward.1} parent=1 // pred_fallthru
      _
    // Predicated region
    $region22: #{feed_forward.1} parent=1 // pred_check
      _
    $region23: #{feed_forward.1} parent=1 // pred_check_branch
      %24 = sbr.rel (0) target = $region25
    $region24: #{feed_forward.1} parent=1 // pred_region
      _
    $region25: #{feed_forward.1} parent=1 // pred_fallthru
      _
    // Predicated region
    $region26: #{feed_forward.1} parent=1 // pred_check
      _
    $region27: #{feed_forward.1} parent=1 // pred_check_branch
      %26 = sbr.rel (0) target = $region29
    $region28: #{feed_forward.1} parent=1 // pred_region
      _
    $region29: #{feed_forward.1} parent=1 // pred_fallthru
      _
    %v28 = vld [vmem:[%s0] sm:$0xff]
    %v29 = vld [vmem:[%s0 + $0x8] sm:$0xff]
    %vm30 = vcmask 261120
    %v31 = vsel %vm30, %v28, 0.0
    %32 = vadd.xlane.f32.xlu0 %v31
    %v33 = vpop.xlane.xlu0 %32
    %v34 = vsel %vm30, %v29, 0.0
    %35 = vadd.xlane.f32.xlu0 %v34
    %v36 = vpop.xlane.xlu0 %35
    %v37 = vrcp.pop 32.0
    %v38 = vmul.f32 32.0, %v37
    %v39 = vsub.f32 1.0, %v38
    %v40 = vmul.f32 %v37, %v39
    %v41 = vadd.f32 %v37, %v40
    %vm42 = vweird.f32 %v37
    %v43 = vsel %vm42, %v37, %v41
    %v44 = vmul.f32 %v33, %v43
    %v45 = vmul.f32 %v36, %v43
    %v46 = vmul.f32 %v28, %v28
    %v47 = vmul.f32 %v29, %v29
    %v48 = vsel %vm30, %v46, 0.0
    %49 = vadd.xlane.f32.xlu0 %v48
    %v50 = vpop.xlane.xlu0 %49
    %v51 = vsel %vm30, %v47, 0.0
    %52 = vadd.xlane.f32.xlu0 %v51
    %v53 = vpop.xlane.xlu0 %52
    %v54 = vmul.f32 %v50, %v43
    %v55 = vmul.f32 %v53, %v43
    %v56 = vmul.f32 %v44, %v44
    %v57 = vmul.f32 %v45, %v45
    %v58 = vsub.f32 %v54, %v56
    %v59 = vsub.f32 %v55, %v57
    %v60 = vmax.f32 %v58, 0.0
    %v61 = vmax.f32 %v59, 0.0
    %v62 = vsub.f32 %v28, %v44
    %v63 = vsub.f32 %v29, %v45
    %v64 = vadd.f32 %v60, 1e-05
    %v65 = vadd.f32 %v61, 1e-05
    %v66 = vrsqrt.pop %v64
    %v67 = vmul.f32 %v66, %v64
    %v68 = vmul.f32 %v67, %v66
    %v69 = vmul.f32 0.5, %v68
    %v70 = vsub.f32 1.5, %v69
    %v71 = vmul.f32 %v66, %v70
    %vm72 = vweird.f32 %v64
    %vm73 = vweird.f32 %v66
    %vm74 = vmor %vm72, %vm73
    %v75 = vsel %vm74, %v66, %v71
    %v76 = vrsqrt.pop %v65
    %v77 = vmul.f32 %v76, %v65
    %v78 = vmul.f32 %v77, %v76
    %v79 = vmul.f32 0.5, %v78
    %v80 = vsub.f32 1.5, %v79
    %v81 = vmul.f32 %v76, %v80
    %vm82 = vweird.f32 %v65
    %vm83 = vweird.f32 %v76
    %vm84 = vmor %vm82, %vm83
    %v85 = vsel %vm84, %v76, %v81
    %v86 = vmul.f32 %v62, %v75
    %v87 = vmul.f32 %v63, %v85
    %v88 = vld [vmem:[%s1] sm:$0x1]
    %v90 = vperm.slane %v88, 0
    %v92 = vmul.f32 %v86, %v90
    %v93 = vmul.f32 %v87, %v90
    %v94 = vld [vmem:[%s2] sm:$0x1]
    %v96 = vperm.slane %v94, 0
    %v98 = vadd.f32 %v92, %v96
    %v99 = vadd.f32 %v93, %v96
    %v100 = vpack.c.bf16 %v99, %v98
    %v101 = vld [vmem:[%s3] sm:$0xff]
    %v102 = vld [vmem:[%s3 + $0x8] sm:$0xff]
    %v103 = vld [vmem:[%s3 + $0x10] sm:$0xff]
    %v104 = vld [vmem:[%s3 + $0x18] sm:$0xff]
    %v105 = vpack.c.bf16 %v102, %v101
    %v106 = vpack.c.bf16 %v104, %v103
    %v107 = vld [vmem:[%s4] sm:$0x1]
    %v109 = vperm.slane %v107, 0
    %v112 = vsel %vm30, %v100, 0
    %114 = vmatpush.bf16.msra.mxu0 0
    %115 = vmatpush.bf16.msra.mxu0 0
    %116 = vmatpush.bf16.msra.mxu0 0
    %117 = vmatpush.bf16.msra.mxu0 0
    %118 = vmatpush.bf16.msra.mxu0 0
    %119 = vmatpush.bf16.msra.mxu0 0
    %120 = vmatpush.bf16.msra.mxu0 %v106
    %121 = vmatpush.bf16.msra.mxu0 %v105
    %122 = vmatmul.bf16.gmra.mxu0 %v112
    %v123 = vpop.f32.mrf.mxu0
    %v124 = vadd.f32 %v109, %v123
    %v125 = vpop.f32.mrf.mxu0
    %v126 = vadd.f32 %v109, %v125
    %127 = vdwg.mxu0
    %v128 = vmul.f32 %v124, 0.5
    %v129 = vmul.f32 %v126, 0.5
    %v130 = vmul.f32 %v124, 0.70710677
    %v131 = vmul.f32 %v126, 0.70710677
    %v132 = vmul.f32 %v130, %v130
    %v133 = vmin.f32 16.0, %v132
    %v134 = vmul.f32 %v133, 2.1237322e-06
    %v135 = vadd.f32 %v134, 0.00028619796
    %v136 = vmul.f32 %v133, %v135
    %v137 = vadd.f32 %v136, 0.0036580483
    %v138 = vmul.f32 %v133, %v137
    %v139 = vadd.f32 %v138, 0.05243302
    %v140 = vmul.f32 %v133, %v139
    %v141 = vadd.f32 %v140, 0.18741608
    %v142 = vmul.f32 %v133, %v141
    %v143 = vadd.f32 %v142, 1.1283791
    %v144 = vmul.f32 %v130, %v143
    %v145 = vmul.f32 %v133, 3.8918573e-05
    %v146 = vadd.f32 %v145, 0.001143296
    %v147 = vmul.f32 %v133, %v146
    %v148 = vadd.f32 %v147, 0.014752088
    %v149 = vmul.f32 %v133, %v148
    %v150 = vadd.f32 %v149, 0.112945676
    %v151 = vmul.f32 %v133, %v150
    %v152 = vadd.f32 %v151, 0.4994258
    %v153 = vmul.f32 %v133, %v152
    %v154 = vadd.f32 %v153, 1.0
    %v155 = vrcp.pop %v154
    %v156 = vmul.f32 %v154, %v155
    %v157 = vsub.f32 1.0, %v156
    %v158 = vmul.f32 %v155, %v157
    %v159 = vadd.f32 %v155, %v158
    %vm160 = vweird.f32 %v154
    %vm161 = vweird.f32 %v155
    %vm162 = vmor %vm160, %vm161
    %v163 = vsel %vm162, %v155, %v159
    %v164 = vand.u32 2147483647, %v154
    %vm165 = vcmp.eq.f32.partialorder %v164, 8.507059e+37
    %v166 = vand.u32 %v154, 2147483648
    %v167 = vor.u32 1.1754944e-38, %v166
    %v168 = vsel %vm165, %v167, %v163
    %v169 = vmul.f32 %v144, %v168
    %v170 = vmin.f32 %v169, 1.0
    %v171 = vmax.f32 %v170, -1.0
    %v172 = vmul.f32 %v131, %v131
    %v173 = vmin.f32 16.0, %v172
    %v174 = vmul.f32 %v173, 2.1237322e-06
    %v175 = vadd.f32 %v174, 0.00028619796
    %v176 = vmul.f32 %v173, %v175
    %v177 = vadd.f32 %v176, 0.0036580483
    %v178 = vmul.f32 %v173, %v177
    %v179 = vadd.f32 %v178, 0.05243302
    %v180 = vmul.f32 %v173, %v179
    %v181 = vadd.f32 %v180, 0.18741608
    %v182 = vmul.f32 %v173, %v181
    %v183 = vadd.f32 %v182, 1.1283791
    %v184 = vmul.f32 %v131, %v183
    %v185 = vmul.f32 %v173, 3.8918573e-05
    %v186 = vadd.f32 %v185, 0.001143296
    %v187 = vmul.f32 %v173, %v186
    %v188 = vadd.f32 %v187, 0.014752088
    %v189 = vmul.f32 %v173, %v188
    %v190 = vadd.f32 %v189, 0.112945676
    %v191 = vmul.f32 %v173, %v190
    %v192 = vadd.f32 %v191, 0.4994258
    %v193 = vmul.f32 %v173, %v192
    %v194 = vadd.f32 %v193, 1.0
    %v195 = vrcp.pop %v194
    %v196 = vmul.f32 %v194, %v195
    %v197 = vsub.f32 1.0, %v196
    %v198 = vmul.f32 %v195, %v197
    %v199 = vadd.f32 %v195, %v198
    %vm200 = vweird.f32 %v194
    %vm201 = vweird.f32 %v195
    %vm202 = vmor %vm200, %vm201
    %v203 = vsel %vm202, %v195, %v199
    %v204 = vand.u32 2147483647, %v194
    %vm205 = vcmp.eq.f32.partialorder %v204, 8.507059e+37
    %v206 = vand.u32 %v194, 2147483648
    %v207 = vor.u32 1.1754944e-38, %v206
    %v208 = vsel %vm205, %v207, %v203
    %v209 = vmul.f32 %v184, %v208
    %v210 = vmin.f32 %v209, 1.0
    %v211 = vmax.f32 %v210, -1.0
    %v212 = vadd.f32 %v171, 1.0
    %v213 = vadd.f32 %v211, 1.0
    %v214 = vmul.f32 %v128, %v212
    %v215 = vmul.f32 %v129, %v213
    %v216 = vpack.c.bf16 %v215, %v214
    %v217 = vld [vmem:[%s5] sm:$0xff]
    %v218 = vld [vmem:[%s5 + $0x8] sm:$0xff]
    %v219 = vld [vmem:[%s5 + $0x10] sm:$0xff]
    %v220 = vld [vmem:[%s5 + $0x18] sm:$0xff]
    %v221 = vld [vmem:[%s5 + $0x20] sm:$0xff]
    %v222 = vld [vmem:[%s5 + $0x28] sm:$0xff]
    %v223 = vld [vmem:[%s5 + $0x30] sm:$0xff]
    %v224 = vld [vmem:[%s5 + $0x38] sm:$0xff]
    %v225 = vpack.c.bf16 %v218, %v217
    %v226 = vpack.c.bf16 %v220, %v219
    %v227 = vpack.c.bf16 %v222, %v221
    %v228 = vpack.c.bf16 %v224, %v223
    %v229 = vld [vmem:[%s6] sm:$0x1]
    %v231 = vperm.slane %v229, 0
    %vm233 = vcmask 523264
    %v235 = vsel %vm233, %v216, 0
    %237 = vmatpush.bf16.msra.mxu0 0
    %238 = vmatpush.bf16.msra.mxu0 0
    %239 = vmatpush.bf16.msra.mxu0 0
    %240 = vmatpush.bf16.msra.mxu0 0
    %241 = vmatpush.bf16.msra.mxu0 %v228
    %242 = vmatpush.bf16.msra.mxu0 %v227
    %243 = vmatpush.bf16.msra.mxu0 %v226
    %244 = vmatpush.bf16.msra.mxu0 %v225
    %245 = vmatmul.bf16.gmra.mxu0 %v235
    %v246 = vpop.f32.mrf.mxu0
    %v247 = vadd.f32 %v231, %v246
    %v248 = vpop.f32.mrf.mxu0
    %v249 = vadd.f32 %v231, %v248
    %250 = vdwg.mxu0
    %251 = vst.msk [vmem:[#allocation2] sm:$0xff] %vm30, %v247
    %252 = vst.msk [vmem:[#allocation2 + $0x8] sm:$0xff] %vm30, %v249
    // Predicated region
    $region30: #{feed_forward.1} parent=1 // pred_check
      _
    $region31: #{feed_forward.1} parent=1 // pred_check_branch
      %254 = sbr.rel (0) target = $region33
    $region32: #{feed_forward.1} parent=1 // pred_region
      %256 = vsyncadd [#allocation3], 0
      %s257 = sshll.u32 [#allocation2], 4
      %s258 = int_to_ptr.vmem [resolvable:$true] %s257
      %s259 = sshll.u32 %s7, 4
      %s260 = int_to_ptr.hbm [resolvable:$true] %s259
      %265 = dma.vmem_to_hbm [thread:$0]  %s258, 256, %s260, [#allocation3], 128, 128, 8
    $region33: #{feed_forward.1} parent=1 // pred_fallthru
      _
    // Predicated region
    $region34: #{feed_forward.1} parent=1 // pred_check
      _
    $region35: #{feed_forward.1} parent=1 // pred_check_branch
      %267 = sbr.rel (0) target = $region37
    $region36: #{feed_forward.1} parent=1 // pred_region
      %269 = dma.done [#allocation3], 256
    $region37: #{feed_forward.1} parent=1 // pred_fallthru
      _
    %270 = vsyncpa [#allocation3], 1

</llo_original>
